<compile_context>
chip_gen: v6e
topology: v6e:2x2x1
jax: 0.10.0
libtpu: 0.0.40
codegen_flags: <defaults>
</compile_context>

<pallas_src>
import functools

import jax
import jax.numpy as jnp
from jax.experimental import pallas as pl
from jax.experimental.pallas import tpu as pltpu

BN_EPS = 1e-5


def _round_up(x, m):
    return (x + m - 1) // m * m


def _pick_tile(dim_pad, pref=512):
    """Largest of {512, 256, 128} that divides dim_pad (dim_pad is a multiple of 128)."""
    for t in (pref, 256, 128):
        if t <= dim_pad and dim_pad % t == 0:
            return t
    return dim_pad


def _vmem_cap_bytes():
    try:
        return int(pltpu.get_tpu_info().vmem_capacity_bytes)
    except Exception:
        return 64 * 2**20  # conservative: v7x per-TensorCore VMEM


def _transfer_kernel(x_ref, w1t_ref, gamma_ref, beta_ref, trans_ref, *, inv_b):
    # x:     (B_pad, s_pad)   bf16 (padded batch rows are exactly zero)
    # w1t:   (s_pad, tile_t)  bf16 conv1x1 weight, pre-transposed, t_n-tiled
    # gamma: (1, tile_t)      f32
    # beta:  (1, tile_t)      f32
    # trans: (B_pad, tile_t)  out
    # conv1x1 over 1x1 spatial == matmul (MXU, bf16 operands, f32 accumulation)
    z = jnp.dot(x_ref[...], w1t_ref[...], preferred_element_type=jnp.float32)

    # BatchNorm2d training-mode batch statistics. Padded batch rows of x are zero, so
    # their rows of z are zero too: unmasked sums over B_pad rows equal the true-batch
    # sums (no mask needed). One-pass variance (E[z^2]-mean^2) in f32; fine unless
    # |mean| >> std of a channel.
    mean = jnp.sum(z, axis=0, keepdims=True) * inv_b
    mean_sq = jnp.sum(z * z, axis=0, keepdims=True) * inv_b
    var = jnp.maximum(mean_sq - mean * mean, 0.0)

    # Fold BN into per-channel scale/shift, then a single fused apply + ReLU.
    scale = jax.lax.rsqrt(var + BN_EPS) * gamma_ref[...]      # (1, tile_t)
    shift = beta_ref[...] - mean * scale                      # (1, tile_t)
    trans_ref[...] = jnp.maximum(z * scale + shift, 0.0).astype(trans_ref.dtype)


def _classifier_kernel(trans_ref, wct_ref, bc_ref, pred_ref, *scratch, acc_in_output):
    # trans: (B_pad, tile_k)   transferred features (t_n-tiled along reduction axis)
    # wct:   (tile_k, tile_n)  classifier weight, pre-transposed
    # bc:    (1, tile_n)       f32 classifier bias
    # pred:  (B_pad, tile_n)   out (resident across the k axis)
    k = pl.program_id(1)
    acc_ref = pred_ref if acc_in_output else scratch[0]

    @pl.when(k == 0)
    def _():
        acc_ref[...] = jnp.zeros_like(acc_ref)

    acc_ref[...] += jnp.dot(trans_ref[...].astype(wct_ref.dtype), wct_ref[...],
                            preferred_element_type=jnp.float32)

    @pl.when(k == pl.num_programs(1) - 1)
    def _():
        if acc_in_output:
            pred_ref[...] += bc_ref[...]
        else:
            pred_ref[...] = (acc_ref[...] + bc_ref[...]).astype(pred_ref.dtype)


def srrl_forward(feat_s, conv_w, bn_gamma, bn_beta, cls_w, cls_b,
                 *, mm_dtype=jnp.bfloat16):
    """feat_s: (B, s_n); conv_w: (t_n, s_n); cls_w: (n_cls, t_n).

    Returns (trans_feat_s (B, t_n), pred_feat_s (B, n_cls)).
    """
    B, s_n = feat_s.shape
    t_n = conv_w.shape[0]
    n_cls = cls_w.shape[0]
    out_dtype = jnp.dtype(feat_s.dtype)
    out_bytes = out_dtype.itemsize

    # ---- host-side padding to lane/sublane-dense, MXU-friendly shapes ----
    B_pad = max(_round_up(B, 8), 8)
    s_pad = _round_up(s_n, 128)
    t_pad = _round_up(t_n, 128)
    n_pad = _round_up(n_cls, 128)

    tile_t = _pick_tile(t_pad)   # transfer-kernel output tile (over t_n)
    tile_k = _pick_tile(t_pad)   # classifier reduction tile   (over t_n)
    tile_n = _pick_tile(n_pad)   # classifier output tile      (over n_cls)

    # Parameter glue (plain JAX, outside the kernels): pre-transpose weights, cast MXU
    # operands to bf16 once, zero-pad everything (zero padding is exact here).
    x = jnp.zeros((B_pad, s_pad), mm_dtype).at[:B, :s_n].set(feat_s.astype(mm_dtype))
    w1t = jnp.zeros((s_pad, t_pad), mm_dtype).at[:s_n, :t_n].set(
        jnp.transpose(conv_w).astype(mm_dtype))
    gamma = jnp.zeros((1, t_pad), jnp.float32).at[0, :t_n].set(
        bn_gamma.astype(jnp.float32))
    beta = jnp.zeros((1, t_pad), jnp.float32).at[0, :t_n].set(
        bn_beta.astype(jnp.float32))
    wct = jnp.zeros((t_pad, n_pad), mm_dtype).at[:t_n, :n_cls].set(
        jnp.transpose(cls_w).astype(mm_dtype))
    bc = jnp.zeros((1, n_pad), jnp.float32).at[0, :n_cls].set(
        cls_b.astype(jnp.float32))

    vmem_cap = _vmem_cap_bytes()

    def _limit(needed_bytes):
        # Generation-aware cap: never request more than ~70% of physical VMEM
        # (v7x: 64 MiB / TC), never less than 24 MiB (above v5e's 16 MiB scoped default).
        return int(min(0.70 * vmem_cap, max(2 * needed_bytes, 24 * 2**20)))

    # ---------------- kernel 1: conv1x1 + BatchNorm + ReLU ----------------
    grid_t = t_pad // tile_t
    vmem1 = (2 * B_pad * s_pad * 2 + 2 * s_pad * tile_t * 2
             + 4 * tile_t * 4 + 2 * B_pad * tile_t * out_bytes)

    trans_p = pl.pallas_call(
        functools.partial(_transfer_kernel, inv_b=1.0 / float(B)),
        out_shape=jax.ShapeDtypeStruct((B_pad, t_pad), out_dtype),
        grid_spec=pltpu.PrefetchScalarGridSpec(
            num_scalar_prefetch=0,
            grid=(grid_t,),
            in_specs=[
                pl.BlockSpec((B_pad, s_pad), lambda j: (0, 0)),   # x (resident)
                pl.BlockSpec((s_pad, tile_t), lambda j: (0, j)),  # w1t tile
                pl.BlockSpec((1, tile_t), lambda j: (0, j)),      # gamma tile
                pl.BlockSpec((1, tile_t), lambda j: (0, j)),      # beta tile
            ],
            out_specs=pl.BlockSpec((B_pad, tile_t), lambda j: (0, j)),
        ),
        compiler_params=pltpu.CompilerParams(
            dimension_semantics=("parallel",),       # t_n tiles are independent
            vmem_limit_bytes=_limit(vmem1)),
        cost_estimate=pl.CostEstimate(
            flops=2 * B_pad * s_pad * t_pad,
            transcendentals=t_pad,
            bytes_accessed=(B_pad * s_pad * 2 + s_pad * t_pad * 2 + 2 * t_pad * 4
                            + B_pad * t_pad * out_bytes)),
    )(x, w1t, gamma, beta)

    # ---------------- kernel 2: teacher classifier (Linear t_n -> n_cls) ----------------
    grid_n = n_pad // tile_n
    grid_k = t_pad // tile_k
    acc_in_output = (out_dtype == jnp.dtype(jnp.float32))
    scratch_shapes = [] if acc_in_output else [pltpu.VMEM((B_pad, tile_n), jnp.float32)]
    vmem2 = (2 * B_pad * tile_k * out_bytes + 2 * tile_k * tile_n * 2
             + 2 * tile_n * 4 + 2 * B_pad * tile_n * out_bytes
             + (0 if acc_in_output else B_pad * tile_n * 4))

    pred_p = pl.pallas_call(
        functools.partial(_classifier_kernel, acc_in_output=acc_in_output),
        out_shape=jax.ShapeDtypeStruct((B_pad, n_pad), out_dtype),
        grid_spec=pltpu.PrefetchScalarGridSpec(
            num_scalar_prefetch=0,
            grid=(grid_n, grid_k),
            in_specs=[
                pl.BlockSpec((B_pad, tile_k), lambda n, k: (0, k)),   # trans tile
                pl.BlockSpec((tile_k, tile_n), lambda n, k: (k, n)),  # wct tile
                pl.BlockSpec((1, tile_n), lambda n, k: (0, n)),       # bias tile
            ],
            out_specs=pl.BlockSpec((B_pad, tile_n), lambda n, k: (0, n)),
            scratch_shapes=scratch_shapes,
        ),
        compiler_params=pltpu.CompilerParams(
            # n_cls tiles independent ("parallel", megacore-shardable on v7x);
            # t_n is the reduction axis of the matmul ("arbitrary").
            dimension_semantics=("parallel", "arbitrary"),
            vmem_limit_bytes=_limit(vmem2)),
        cost_estimate=pl.CostEstimate(
            flops=2 * B_pad * t_pad * n_pad,
            transcendentals=0,
            bytes_accessed=(B_pad * t_pad * out_bytes + t_pad * n_pad * 2
                            + n_pad * 4 + B_pad * n_pad * out_bytes)),
    )(trans_p, wct, bc)

    # Slice away padding.
    return trans_p[:B, :t_n], pred_p[:B, :n_cls]


def srrl_reference(feat_s, conv_w, bn_gamma, bn_beta, cls_w, cls_b):
    """Pure-JAX (f32) reference for correctness checking."""
    z = feat_s @ conv_w.T
    mean = jnp.mean(z, axis=0, keepdims=True)
    var = jnp.mean((z - mean) ** 2, axis=0, keepdims=True)
    y = (z - mean) / jnp.sqrt(var + BN_EPS) * bn_gamma + bn_beta
    trans = jnp.maximum(y, 0.0)
    pred = trans @ cls_w.T + cls_b
    return trans, pred


if __name__ == "__main__":
    B, s_n, t_n, n_cls = 4, 32, 64, 16

    key = jax.random.PRNGKey(0)
    k_x, k_w1, k_g, k_b, k_wc, k_bc = jax.random.split(key, 6)

    feat_s = jax.random.normal(k_x, (B, s_n), dtype=jnp.float32)
    conv_w = jax.random.normal(k_w1, (t_n, s_n), dtype=jnp.float32) * 0.1
    bn_gamma = 1.0 + 0.05 * jax.random.normal(k_g, (t_n,), dtype=jnp.float32)
    bn_beta = 0.05 * jax.random.normal(k_b, (t_n,), dtype=jnp.float32)
    cls_w = jax.random.normal(k_wc, (n_cls, t_n), dtype=jnp.float32) * 0.1
    cls_b = 0.01 * jax.random.normal(k_bc, (n_cls,), dtype=jnp.float32)

    trans, pred = srrl_forward(feat_s, conv_w, bn_gamma, bn_beta, cls_w, cls_b)
    jax.block_until_ready((trans, pred))

    trans_ref, pred_ref = srrl_reference(feat_s, conv_w, bn_gamma, bn_beta, cls_w, cls_b)
    assert trans.shape == (B, t_n) and pred.shape == (B, n_cls)
    # bf16 MXU operands (f32 accumulation) -> tolerance relaxed vs. the pure-f32 ref.
    assert jnp.allclose(trans, trans_ref, atol=5e-2, rtol=5e-2), (
        float(jnp.max(jnp.abs(trans - trans_ref))))
    assert jnp.allclose(pred, pred_ref, atol=5e-2, rtol=5e-2), (
        float(jnp.max(jnp.abs(pred - pred_ref))))

    print("KERNEL_OK")
</pallas_src>

<mosaic_0001>
module attributes {stable_mosaic.version = 11 : i64} {
  func.func @_transfer_kernel(%arg0: i32, %arg1: memref<8x128xbf16, #tpu.memory_space<vmem>>, %arg2: memref<128x128xbf16, #tpu.memory_space<vmem>>, %arg3: memref<1x128xf32, #tpu.memory_space<vmem>>, %arg4: memref<1x128xf32, #tpu.memory_space<vmem>>, %arg5: memref<8x128xf32, #tpu.memory_space<vmem>>) attributes {dimension_semantics = [#tpu.dimension_semantics<parallel>], iteration_bounds = array<i64: 1>, scalar_prefetch = 0 : i64, scratch_operands = 0 : i64, tpu.core_type = #tpu.core_type<tc>, window_params = [{pipeline_mode = #tpu.pipeline_mode<synchronous>, transform_indices = @transform_0, window_bounds = array<i64: 8, 128>}, {transform_indices = @transform_1, window_bounds = array<i64: 128, 128>}, {transform_indices = @transform_2, window_bounds = array<i64: 1, 128>}, {transform_indices = @transform_3, window_bounds = array<i64: 1, 128>}, {transform_indices = @transform_4, window_bounds = array<i64: 8, 128>}]} {
    %c0 = arith.constant 0 : index
    %c0_0 = arith.constant 0 : index
    %0 = vector.load %arg1[%c0, %c0_0] : memref<8x128xbf16, #tpu.memory_space<vmem>>, vector<8x128xbf16>
    %c0_1 = arith.constant 0 : index
    %c0_2 = arith.constant 0 : index
    %1 = vector.load %arg2[%c0_1, %c0_2] : memref<128x128xbf16, #tpu.memory_space<vmem>>, vector<128x128xbf16>
    %cst = arith.constant dense<0.000000e+00> : vector<8x128xf32>
    %2 = tpu.matmul %0, %1, %cst {dimension_numbers = #tpu.dot_dimension_numbers<[1], [0], [0], [1], [0, 0, 1, 1], [], []>} : vector<8x128xbf16>, vector<128x128xbf16>, vector<8x128xf32> -> vector<8x128xf32>
    %cst_3 = arith.constant dense<0.000000e+00> : vector<128xf32>
    %3 = vector.multi_reduction <add>, %2, %cst_3 [0] : vector<8x128xf32> to vector<128xf32>
    %4 = vector.shape_cast %3 : vector<128xf32> to vector<1x128xf32>
    %cst_4 = arith.constant 2.500000e-01 : f32
    %5 = vector.broadcast %cst_4 : f32 to vector<1x128xf32>
    %6 = arith.mulf %4, %5 : vector<1x128xf32>
    %7 = arith.mulf %2, %2 : vector<8x128xf32>
    %cst_5 = arith.constant dense<0.000000e+00> : vector<128xf32>
    %8 = vector.multi_reduction <add>, %7, %cst_5 [0] : vector<8x128xf32> to vector<128xf32>
    %9 = vector.shape_cast %8 : vector<128xf32> to vector<1x128xf32>
    %cst_6 = arith.constant 2.500000e-01 : f32
    %10 = vector.broadcast %cst_6 : f32 to vector<1x128xf32>
    %11 = arith.mulf %9, %10 : vector<1x128xf32>
    %12 = arith.mulf %6, %6 : vector<1x128xf32>
    %13 = arith.subf %11, %12 : vector<1x128xf32>
    %cst_7 = arith.constant 0.000000e+00 : f32
    %14 = vector.broadcast %cst_7 : f32 to vector<1x128xf32>
    %15 = arith.maximumf %13, %14 : vector<1x128xf32>
    %cst_8 = arith.constant 9.99999974E-6 : f32
    %16 = vector.broadcast %cst_8 : f32 to vector<1x128xf32>
    %17 = arith.addf %15, %16 : vector<1x128xf32>
    %18 = math.rsqrt %17 : vector<1x128xf32>
    %c0_9 = arith.constant 0 : index
    %c0_10 = arith.constant 0 : index
    %19 = vector.load %arg3[%c0_9, %c0_10] : memref<1x128xf32, #tpu.memory_space<vmem>>, vector<1x128xf32>
    %20 = arith.mulf %18, %19 : vector<1x128xf32>
    %c0_11 = arith.constant 0 : index
    %c0_12 = arith.constant 0 : index
    %21 = vector.load %arg4[%c0_11, %c0_12] : memref<1x128xf32, #tpu.memory_space<vmem>>, vector<1x128xf32>
    %22 = arith.mulf %6, %20 : vector<1x128xf32>
    %23 = arith.subf %21, %22 : vector<1x128xf32>
    %24 = vector.broadcast %20 : vector<1x128xf32> to vector<8x128xf32>
    %25 = arith.mulf %2, %24 : vector<8x128xf32>
    %26 = vector.broadcast %23 : vector<1x128xf32> to vector<8x128xf32>
    %27 = arith.addf %25, %26 : vector<8x128xf32>
    %cst_13 = arith.constant 0.000000e+00 : f32
    %28 = vector.broadcast %cst_13 : f32 to vector<8x128xf32>
    %29 = arith.maximumf %27, %28 : vector<8x128xf32>
    %c0_14 = arith.constant 0 : index
    %c0_15 = arith.constant 0 : index
    %30 = vector.load %arg5[%c0_14, %c0_15] : memref<8x128xf32, #tpu.memory_space<vmem>>, vector<8x128xf32>
    tpu.vector_store %arg5[%c0_14, %c0_15], %29 {strides = array<i32>} : memref<8x128xf32, #tpu.memory_space<vmem>>, vector<8x128xf32>,
    return
  }
  func.func @transform_0(%arg0: i32) -> (i32, i32) {
    %c0_i32 = arith.constant 0 : i32
    %c0_i32_0 = arith.constant 0 : i32
    %c0_i32_1 = arith.constant 0 : i32
    return %c0_i32, %c0_i32_0 : i32, i32
  }
  func.func @transform_1(%arg0: i32) -> (i32, i32) {
    %c0_i32 = arith.constant 0 : i32
    %c0_i32_0 = arith.constant 0 : i32
    return %c0_i32, %arg0 : i32, i32
  }
  func.func @transform_2(%arg0: i32) -> (i32, i32) {
    %c0_i32 = arith.constant 0 : i32
    %c0_i32_0 = arith.constant 0 : i32
    return %c0_i32, %arg0 : i32, i32
  }
  func.func @transform_3(%arg0: i32) -> (i32, i32) {
    %c0_i32 = arith.constant 0 : i32
    %c0_i32_0 = arith.constant 0 : i32
    return %c0_i32, %arg0 : i32, i32
  }
  func.func @transform_4(%arg0: i32) -> (i32, i32) {
    %c0_i32 = arith.constant 0 : i32
    %c0_i32_0 = arith.constant 0 : i32
    return %c0_i32, %arg0 : i32, i32
  }
}

</mosaic_0001>

<llo_original>
// kernel: tpu_custom_call.1
$region0: #{tpu_custom_call.1}
  #allocation0 [shape = 'u32[]', space=smem, size = 0x4, offset = 0x4, fixed_abs, tag = 'smem constant byte address 0x4 - core index']
  #allocation1 [shape = 'u32[144,128]{1,0:T(1,128)}', space=vmem, size = 0x12000, scoped, tag = 'internal scratch']
  %s0 = inlined_call_operand.hbm [shape: bf16[8,128], index: 0, kind: input, shape index: {}]
  %s1 = inlined_call_operand.hbm [shape: bf16[128,128], index: 1, kind: input, shape index: {}]
  %s2 = inlined_call_operand.vmem [shape: f32[1,128], index: 2, kind: input, shape index: {}]
  %s3 = inlined_call_operand.vmem [shape: f32[1,128], index: 3, kind: input, shape index: {}]
  %s4 = inlined_call_operand.hbm [shape: f32[8,128], index: 4, kind: output, shape index: {}]
  %s5 = sld [smem:[#allocation0]]
  $region34: #{tpu_custom_call.1} parent=0
    _
  %s7 = ssub.s32 1, %s5
  %s8 = scalar_select 0, %s7, %s5
  $region1: #{tpu_custom_call.1} parent=0
    #allocation2 [shape = 'u8[2048]{0}', space=vmem, size = 0x800, scoped, tag = 'input window, operand 0, single buffered']
    #allocation3 [shape = 's32[1]{0}', space=sflag, size = 0x4, scoped, tag = 'scoped memory for tpu_custom_call.1']
    #allocation4 [shape = 's32[1]{0}', space=sflag, size = 0x4, scoped, tag = 'scoped memory for tpu_custom_call.1']
    #allocation5 [shape = 'u8[32768]{0}', space=vmem, size = 0x8000, scoped, tag = 'input window, operand 1, single buffered']
    #allocation6 [shape = 's32[1]{0}', space=sflag, size = 0x4, scoped, tag = 'scoped memory for tpu_custom_call.1']
    #allocation7 [shape = 'u8[4096]{0}', space=vmem, size = 0x1000, scoped, tag = 'output window, operand 0, single buffered']
    %9 = vsyncpa [#allocation3], 0
    %10 = vsyncpa [#allocation6], 0
    %11 = vsyncpa [#allocation4], 0
    // Predicated region
    $region2: #{tpu_custom_call.1} parent=1 // pred_check
      _
    $region3: #{tpu_custom_call.1} parent=1 // pred_check_branch
      %13 = sbr.rel (0) target = $region5
    $region4: #{tpu_custom_call.1} parent=1 // pred_region
      %s15 = ssub.s32 64, 64
      %16 = vsyncadd [#allocation3], %s15
      %s18 = sshll.u32 [#allocation2], 4
      %s19 = int_to_ptr.vmem [resolvable:$true] %s18
      %21 = dma.hbm_to_vmem [thread:$0]  %s0, 64, %s19, [#allocation3]
    $region5: #{tpu_custom_call.1} parent=1 // pred_fallthru
      _
    // Predicated region
    $region6: #{tpu_custom_call.1} parent=1 // pred_check
      _
    $region7: #{tpu_custom_call.1} parent=1 // pred_check_branch
      %23 = sbr.rel (0) target = $region9
    $region8: #{tpu_custom_call.1} parent=1 // pred_region
      %s25 = ssub.s32 1024, 1024
      %26 = vsyncadd [#allocation6], %s25
      %s27 = sshll.u32 [#allocation5], 4
      %s28 = int_to_ptr.vmem [resolvable:$true] %s27
      %33 = dma.hbm_to_vmem [thread:$0]  %s1, 1024, %s28, [#allocation6], 64, 64, 4
    $region9: #{tpu_custom_call.1} parent=1 // pred_fallthru
      _
    // Predicated region
    $region10: #{tpu_custom_call.1} parent=1 // pred_check
      _
    $region11: #{tpu_custom_call.1} parent=1 // pred_check_branch
      %35 = sbr.rel (0) target = $region13
    $region12: #{tpu_custom_call.1} parent=1 // pred_region
      _
    $region13: #{tpu_custom_call.1} parent=1 // pred_fallthru
      _
    // Predicated region
    $region14: #{tpu_custom_call.1} parent=1 // pred_check
      _
    $region15: #{tpu_custom_call.1} parent=1 // pred_check_branch
      %37 = sbr.rel (0) target = $region17
    $region16: #{tpu_custom_call.1} parent=1 // pred_region
      _
    $region17: #{tpu_custom_call.1} parent=1 // pred_fallthru
      _
    // Predicated region
    $region18: #{tpu_custom_call.1} parent=1 // pred_check
      _
    $region19: #{tpu_custom_call.1} parent=1 // pred_check_branch
      %39 = sbr.rel (0) target = $region21
    $region20: #{tpu_custom_call.1} parent=1 // pred_region
      %40 = dma.done [#allocation3], 64
    $region21: #{tpu_custom_call.1} parent=1 // pred_fallthru
      _
    // Predicated region
    $region22: #{tpu_custom_call.1} parent=1 // pred_check
      _
    $region23: #{tpu_custom_call.1} parent=1 // pred_check_branch
      %42 = sbr.rel (0) target = $region25
    $region24: #{tpu_custom_call.1} parent=1 // pred_region
      %43 = dma.done [#allocation6], 1024
    $region25: #{tpu_custom_call.1} parent=1 // pred_fallthru
      _
    %v45 = vld [vmem:[#allocation2] sm:$0xf]
    %v46 = vld [vmem:[#allocation5] sm:$0xf]
    %v47 = vld [vmem:[#allocation5 + $0x4] sm:$0xf]
    %v48 = vld [vmem:[#allocation5 + $0x8] sm:$0xf]
    %v49 = vld [vmem:[#allocation5 + $0xc] sm:$0xf]
    %v50 = vld [vmem:[#allocation5 + $0x10] sm:$0xf]
    %v51 = vld [vmem:[#allocation5 + $0x14] sm:$0xf]
    %v52 = vld [vmem:[#allocation5 + $0x18] sm:$0xf]
    %v53 = vld [vmem:[#allocation5 + $0x1c] sm:$0xf]
    %v54 = vld [vmem:[#allocation5 + $0x20] sm:$0xf]
    %v55 = vld [vmem:[#allocation5 + $0x24] sm:$0xf]
    %v56 = vld [vmem:[#allocation5 + $0x28] sm:$0xf]
    %v57 = vld [vmem:[#allocation5 + $0x2c] sm:$0xf]
    %v58 = vld [vmem:[#allocation5 + $0x30] sm:$0xf]
    %v59 = vld [vmem:[#allocation5 + $0x34] sm:$0xf]
    %v60 = vld [vmem:[#allocation5 + $0x38] sm:$0xf]
    %v61 = vld [vmem:[#allocation5 + $0x3c] sm:$0xf]
    %v78 = vunpack.c.l.b16 %v46
    %v79 = vunpack.c.l.b16 %v47
    %v80 = vunpack.c.l.b16 %v48
    %v81 = vunpack.c.l.b16 %v49
    %v82 = vunpack.c.l.b16 %v50
    %v83 = vunpack.c.l.b16 %v51
    %v84 = vunpack.c.l.b16 %v52
    %v85 = vunpack.c.l.b16 %v53
    %v86 = vunpack.c.l.b16 %v54
    %v87 = vunpack.c.l.b16 %v55
    %v88 = vunpack.c.l.b16 %v56
    %v89 = vunpack.c.l.b16 %v57
    %v90 = vunpack.c.l.b16 %v58
    %v91 = vunpack.c.l.b16 %v59
    %v92 = vunpack.c.l.b16 %v60
    %v93 = vunpack.c.l.b16 %v61
    %v94 = vpack.c.b16 %v79, %v78
    %v95 = vpack.c.b16 %v81, %v80
    %v96 = vpack.c.b16 %v83, %v82
    %v97 = vpack.c.b16 %v85, %v84
    %v98 = vpack.c.b16 %v87, %v86
    %v99 = vpack.c.b16 %v89, %v88
    %v100 = vpack.c.b16 %v91, %v90
    %v101 = vpack.c.b16 %v93, %v92
    %110 = vmatprep.subr.bf16.mxu0 0
    %111 = vmatpush1.bf16.msra.mxu0 %v101
    %112 = vmatprep.subr.bf16.mxu0 0
    %113 = vmatpush1.bf16.msra.mxu0 %v100
    %114 = vmatprep.subr.bf16.mxu0 0
    %115 = vmatpush1.bf16.msra.mxu0 %v99
    %116 = vmatprep.subr.bf16.mxu0 0
    %117 = vmatpush1.bf16.msra.mxu0 %v98
    %118 = vmatprep.subr.bf16.mxu0 0
    %119 = vmatpush1.bf16.msra.mxu0 %v97
    %120 = vmatprep.subr.bf16.mxu0 0
    %121 = vmatpush1.bf16.msra.mxu0 %v96
    %122 = vmatprep.subr.bf16.mxu0 0
    %123 = vmatpush1.bf16.msra.mxu0 %v95
    %124 = vmatprep.subr.bf16.mxu0 0
    %125 = vmatpush1.bf16.msra.mxu0 %v94
    %126 = vmatprep.subr.bf16.mxu0 0
    %127 = vmatpush2.bf16.msra.mxu0 0
    %128 = vmatprep.subr.bf16.mxu0 0
    %129 = vmatpush2.bf16.msra.mxu0 0
    %130 = vmatprep.subr.bf16.mxu0 0
    %131 = vmatpush2.bf16.msra.mxu0 0
    %132 = vmatprep.subr.bf16.mxu0 0
    %133 = vmatpush2.bf16.msra.mxu0 0
    %134 = vmatprep.subr.bf16.mxu0 0
    %135 = vmatpush2.bf16.msra.mxu0 0
    %136 = vmatprep.subr.bf16.mxu0 0
    %137 = vmatpush2.bf16.msra.mxu0 0
    %138 = vmatprep.subr.bf16.mxu0 0
    %139 = vmatpush2.bf16.msra.mxu0 0
    %140 = vmatprep.subr.bf16.mxu0 0
    %141 = vmatpush2.bf16.msra.mxu0 0
    %142 = vmatprep.mubr.bf16.mxu0 0
    %143 = vmatmul.mubr.bf16.gmra.mxu0 %v45
    %v144 = vpop.f32.mrf.mxu0
    %v145 = vadd.f32 0.0, %v144
    %v146 = vpop.f32.mrf.mxu0
    %v147 = vpop.f32.mrf.mxu0
    %v148 = vpop.f32.mrf.mxu0
    %149 = vdwg.mxu0
    %v150 = vrot.slane %v145, 4
    %v151 = vadd.f32 %v145, %v150
    %v152 = vrot.slane %v151, 2
    %v153 = vadd.f32 %v151, %v152
    %v154 = vrot.slane %v153, 1
    %v155 = vadd.f32 %v153, %v154
    %v156 = vmul.f32 %v155, 0.25
    %v157 = vmul.f32 %v145, %v145
    %v158 = vrot.slane %v157, 4
    %v159 = vadd.f32 %v157, %v158
    %v160 = vrot.slane %v159, 2
    %v161 = vadd.f32 %v159, %v160
    %v162 = vrot.slane %v161, 1
    %v163 = vadd.f32 %v161, %v162
    %v164 = vmul.f32 %v163, 0.25
    %v165 = vmul.f32 %v156, %v156
    %v166 = vsub.f32 %v164, %v165
    %v167 = vmax.f32 %v166, 0.0
    %v168 = vadd.f32 %v167, 1e-05
    %v169 = vrsqrt.pop %v168
    %v170 = vld [vmem:[%s2] sm:$0x1]
    %v171 = vmul.f32 %v169, %v170
    %v172 = vld [vmem:[%s3] sm:$0x1]
    %v173 = vmul.f32 %v156, %v171
    %v174 = vsub.f32 %v172, %v173
    %v175 = vlaneseq
    %v176 = vshrl.u32 %v175, 7
    %v177 = vsub.s32 0, %v176
    %v178 = vrot.slane %v171, %v177
    %v179 = vmul.f32 %v145, %v178
    %v181 = vlaneseq
    %v182 = vshrl.u32 %v181, 7
    %v183 = vsub.s32 0, %v182
    %v184 = vrot.slane %v174, %v183
    %v186 = vadd.f32 %v179, %v184
    %v187 = vmax.f32 %v186, 0.0
    %188 = vst [vmem:[#allocation7] sm:$0xff] %v187
    // Predicated region
    $region26: #{tpu_custom_call.1} parent=1 // pred_check
      _
    $region27: #{tpu_custom_call.1} parent=1 // pred_check_branch
      %190 = sbr.rel (0) target = $region29
    $region28: #{tpu_custom_call.1} parent=1 // pred_region
      %s192 = ssub.s32 128, 128
      %193 = vsyncadd [#allocation4], %s192
      %s195 = sshll.u32 [#allocation7], 4
      %s196 = int_to_ptr.vmem [resolvable:$true] %s195
      %198 = dma.vmem_to_hbm [thread:$0]  %s196, 128, %s4, [#allocation4]
    $region29: #{tpu_custom_call.1} parent=1 // pred_fallthru
      _
    // Predicated region
    $region30: #{tpu_custom_call.1} parent=1 // pred_check
      _
    $region31: #{tpu_custom_call.1} parent=1 // pred_check_branch
      %200 = sbr.rel (0) target = $region33
    $region32: #{tpu_custom_call.1} parent=1 // pred_region
      %201 = dma.done [#allocation4], 128
    $region33: #{tpu_custom_call.1} parent=1 // pred_fallthru
      _
    %202 = vsyncpa [#allocation3], 1
    %203 = vsyncpa [#allocation6], 1
    %204 = vsyncpa [#allocation4], 1

</llo_original>
